<compile_context>
chip_gen: v5e
topology: v5e:2x2
jax: 0.10.0
libtpu: 0.0.40
codegen_flags: <defaults>
</compile_context>

<pallas_src>
import functools

import jax
import jax.numpy as jnp
import numpy as np
from jax.experimental import pallas as pl
from jax.experimental.pallas import tpu as pltpu

_LANE = 128


def _round_up(a, b):
    return (a + b - 1) // b * b


def _vmem_limit_bytes():
    cap = 128 << 20
    try:
        info = pltpu.get_tpu_info()
        cap = int(getattr(info, "vmem_capacity_bytes", cap))
    except Exception:
        pass
    # Leave headroom for compiler scratch / double buffers:
    # ~96 MiB on v5e/v6e (128 MiB physical), ~48 MiB on v7x (64 MiB physical).
    return min((cap * 3) // 4, 96 << 20)


def _pad2d(a, rows, cols):
    r, c = a.shape
    return jnp.pad(a, ((0, rows - r), (0, cols - c)))


# --------------------- stage 0 (optional): H = x @ W0 ------------------------

def _linear_kernel(x_ref, w_ref, o_ref):
    o_ref[...] = jnp.dot(
        x_ref[...], w_ref[...], preferred_element_type=jnp.float32
    ).astype(o_ref.dtype)


def _linear(x, w, *, row_tile, vmem_limit):
    n_pad, d_in = x.shape
    d_out = w.shape[1]
    return pl.pallas_call(
        _linear_kernel,
        out_shape=jax.ShapeDtypeStruct((n_pad, d_out), x.dtype),
        grid_spec=pltpu.PrefetchScalarGridSpec(
            num_scalar_prefetch=0,
            grid=(n_pad // row_tile,),
            in_specs=[
                pl.BlockSpec((row_tile, d_in), lambda i: (i, 0)),
                pl.BlockSpec((d_in, d_out), lambda i: (0, 0)),
            ],
            out_specs=pl.BlockSpec((row_tile, d_out), lambda i: (i, 0)),
        ),
        compiler_params=pltpu.CompilerParams(
            dimension_semantics=("parallel",),
            vmem_limit_bytes=vmem_limit,
        ),
    )(x, w)


# ---------------- stage 1: tiled adj aggregation + fused MLP -----------------

def _make_agg_mlp_kernel(num_weights, relu_before_first, compute_dtype):
    """kernel(adj_tile, feat_tile, w_0..w_{nw-1}, out_tile, acc_scratch)."""

    def kernel(adj_ref, f_ref, *refs):
        w_refs = refs[:num_weights]
        out_ref = refs[num_weights]
        acc_ref = refs[num_weights + 1]

        k = pl.program_id(1)

        @pl.when(k == 0)
        def _():
            acc_ref[...] = jnp.zeros_like(acc_ref)

        # Accumulate the N^2 aggregation: acc += adj_tile @ feat_tile (f32 acc).
        acc_ref[...] += jnp.dot(
            adj_ref[...], f_ref[...], preferred_element_type=jnp.float32)

        @pl.when(k == pl.num_programs(1) - 1)
        def _():
            h = acc_ref[...]
            first = 0
            if relu_before_first:
                # First Linear was already applied before aggregation.
                h = jnp.maximum(h, 0.0)
            else:
                # (adj @ x) @ W0 ordering.
                h = jnp.dot(h.astype(compute_dtype), w_refs[0][...],
                            preferred_element_type=jnp.float32)
                h = jnp.maximum(h, 0.0)
                first = 1
            for i in range(first, num_weights - 1):
                h = jnp.dot(h.astype(compute_dtype), w_refs[i][...],
                            preferred_element_type=jnp.float32)
                h = jnp.maximum(h, 0.0)
            out = jnp.dot(h.astype(compute_dtype), w_refs[num_weights - 1][...],
                          preferred_element_type=jnp.float32)
            out_ref[...] = out.astype(out_ref.dtype)

    return kernel


@functools.partial(
    jax.jit, static_argnames=("compute_dtype", "row_tile", "k_tile"))
def mlppool_forward(x, adj_hat, weights_t, *, compute_dtype=jnp.bfloat16,
                    row_tile=256, k_tile=256):
    """MLPPool forward.

    x         : [N, input_size] float32
    adj_hat   : [N, N] dense row-normalized adjacency
    weights_t : list of [in_features, out_features] matrices (PyTorch Linear
                weights pre-transposed so the kernel computes x @ W == x @ W^T).
    """
    n, d_in = x.shape
    num_layers = len(weights_t)
    hidden = weights_t[0].shape[1]
    d_out = weights_t[-1].shape[1]
    out_dtype = x.dtype

    vmem_limit = _vmem_limit_bytes()

    # Lane-dense padded feature dims + tile-aligned node dim.
    n_pad = _round_up(n, max(row_tile, k_tile))
    d_in_pad = _round_up(d_in, _LANE)
    hid_pad = _round_up(hidden, _LANE)
    d_out_pad = _round_up(d_out, _LANE)

    adj_p = _pad2d(adj_hat, n_pad, n_pad).astype(compute_dtype)

    w_pads = []
    for li, w in enumerate(weights_t):
        rin = d_in_pad if li == 0 else hid_pad
        rout = d_out_pad if li == num_layers - 1 else hid_pad
        w_pads.append(_pad2d(w, rin, rout).astype(compute_dtype))

    # Trace-time association-order choice for the N^2 matmul.
    if hidden >= d_in:
        # Aggregate raw features: acc = adj @ x, apply W0 afterwards.
        feat = _pad2d(x, n_pad, d_in_pad).astype(compute_dtype)
        post_weights = w_pads
        relu_before_first = False
        f_feat = d_in_pad
    else:
        # Shrink features first: H = x @ W0, then aggregate H.
        x_p = _pad2d(x, n_pad, d_in_pad).astype(compute_dtype)
        feat = _linear(x_p, w_pads[0], row_tile=row_tile,
                       vmem_limit=vmem_limit)
        post_weights = w_pads[1:]
        relu_before_first = True
        f_feat = hid_pad

    num_w = len(post_weights)
    kernel = _make_agg_mlp_kernel(num_w, relu_before_first, compute_dtype)

    grid = (n_pad // row_tile, n_pad // k_tile)

    in_specs = [
        pl.BlockSpec((row_tile, k_tile), lambda i, k: (i, k)),   # adj tile
        pl.BlockSpec((k_tile, f_feat), lambda i, k: (k, 0)),     # feature tile
    ] + [
        pl.BlockSpec(w.shape, lambda i, k: (0, 0)) for w in post_weights
    ]
    out_spec = pl.BlockSpec((row_tile, d_out_pad), lambda i, k: (i, 0))

    itemsize = jnp.dtype(compute_dtype).itemsize
    flops = 2 * n_pad * n_pad * f_feat + n_pad * sum(
        2 * w.shape[0] * w.shape[1] for w in post_weights)
    bytes_accessed = (
        n_pad * n_pad * itemsize                              # adjacency
        + (n_pad // row_tile) * n_pad * f_feat * itemsize     # features (re-read)
        + sum(w.size * itemsize for w in post_weights)        # weights
        + n_pad * d_out_pad * jnp.dtype(out_dtype).itemsize)  # output

    out_padded = pl.pallas_call(
        kernel,
        out_shape=jax.ShapeDtypeStruct((n_pad, d_out_pad), out_dtype),
        grid_spec=pltpu.PrefetchScalarGridSpec(
            num_scalar_prefetch=0,
            grid=grid,
            in_specs=in_specs,
            out_specs=out_spec,
            scratch_shapes=[pltpu.VMEM((row_tile, f_feat), jnp.float32)],
        ),
        compiler_params=pltpu.CompilerParams(
            dimension_semantics=("parallel", "arbitrary"),
            vmem_limit_bytes=vmem_limit,
        ),
        cost_estimate=pl.CostEstimate(
            flops=int(flops), transcendentals=0,
            bytes_accessed=int(bytes_accessed)),
    )(adj_p, feat, *post_weights)

    return out_padded[:n, :d_out]


def _reference_forward(x, adj_hat, weights_t):
    h = x @ weights_t[0]
    h = adj_hat @ h
    h = jnp.maximum(h, 0.0)
    for w in weights_t[1:-1]:
        h = jnp.maximum(h @ w, 0.0)
    return h @ weights_t[-1]


if __name__ == "__main__":
    # Small, module-consistent shapes.
    N = 8              # number of graph nodes
    input_size = 16
    hidden_size = 32
    output_size = 8
    num_hidden = 3     # layers: in->hid, hid->hid, hid->out

    key = jax.random.PRNGKey(0)
    k_x, k_adj, *k_w = jax.random.split(key, 2 + num_hidden)

    x = jax.random.normal(k_x, (N, input_size), dtype=jnp.float32)

    # Dense "sparse" adjacency: random 0/1 mask + self loops, row-normalized.
    adj_raw = (jax.random.uniform(k_adj, (N, N)) < 0.3).astype(jnp.float32)
    adj_raw = adj_raw + jnp.eye(N, dtype=jnp.float32)
    adj_hat = adj_raw / jnp.sum(adj_raw, axis=1, keepdims=True)

    # PyTorch nn.Linear weight is (out, in), forward is x @ W^T; build the
    # transposed (in, out) matrices directly.
    layer_dims = ([(input_size, hidden_size)]
                  + [(hidden_size, hidden_size)] * (num_hidden - 2)
                  + [(hidden_size, output_size)])
    weights_t = []
    for kw, (din, dout) in zip(k_w, layer_dims):
        bound = 1.0 / np.sqrt(din)  # matches torch Linear default init range
        weights_t.append(
            jax.random.uniform(kw, (din, dout), dtype=jnp.float32,
                               minval=-bound, maxval=bound))

    out = mlppool_forward(x, adj_hat, weights_t)
    out = jax.block_until_ready(out)

    ref = _reference_forward(x, adj_hat, weights_t)
    # bf16 MXU operands with f32 accumulation -> relaxed tolerance vs f32 ref.
    np.testing.assert_allclose(np.asarray(out), np.asarray(ref),
                               rtol=2e-2, atol=2e-2)

    print("KERNEL_OK")
</pallas_src>

<mosaic_0001>
module attributes {stable_mosaic.version = 11 : i64} {
  func.func @kernel(%arg0: i32, %arg1: i32, %arg2: memref<256x256xbf16, #tpu.memory_space<vmem>>, %arg3: memref<256x128xbf16, #tpu.memory_space<vmem>>, %arg4: memref<128x128xbf16, #tpu.memory_space<vmem>>, %arg5: memref<128x128xbf16, #tpu.memory_space<vmem>>, %arg6: memref<128x128xbf16, #tpu.memory_space<vmem>>, %arg7: memref<256x128xf32, #tpu.memory_space<vmem>>, %arg8: memref<256x128xf32, #tpu.memory_space<vmem>>) attributes {dimension_semantics = [#tpu.dimension_semantics<parallel>, #tpu.dimension_semantics<arbitrary>], iteration_bounds = array<i64: 1, 1>, scalar_prefetch = 0 : i64, scratch_operands = 1 : i64, tpu.core_type = #tpu.core_type<tc>, window_params = [{transform_indices = @transform_0, window_bounds = array<i64: 256, 256>}, {transform_indices = @transform_1, window_bounds = array<i64: 256, 128>}, {pipeline_mode = #tpu.pipeline_mode<synchronous>, transform_indices = @transform_2, window_bounds = array<i64: 128, 128>}, {pipeline_mode = #tpu.pipeline_mode<synchronous>, transform_indices = @transform_3, window_bounds = array<i64: 128, 128>}, {pipeline_mode = #tpu.pipeline_mode<synchronous>, transform_indices = @transform_4, window_bounds = array<i64: 128, 128>}, {transform_indices = @transform_5, window_bounds = array<i64: 256, 128>}]} {
    %c0_i32 = arith.constant 0 : i32
    %0 = arith.cmpi eq, %arg1, %c0_i32 : i32
    %1 = arith.extui %0 : i1 to i32
    %c0_i32_0 = arith.constant 0 : i32
    %2 = arith.cmpi ne, %1, %c0_i32_0 : i32
    scf.if %2 {
      %cst_10 = arith.constant 0.000000e+00 : f32
      %12 = vector.broadcast %cst_10 : f32 to vector<256x128xf32>
      %c0_11 = arith.constant 0 : index
      %c0_12 = arith.constant 0 : index
      %13 = vector.load %arg8[%c0_11, %c0_12] : memref<256x128xf32, #tpu.memory_space<vmem>>, vector<256x128xf32>
      tpu.vector_store %arg8[%c0_11, %c0_12], %12 {strides = array<i32>} : memref<256x128xf32, #tpu.memory_space<vmem>>, vector<256x128xf32>,
    } else {
    }
    %c0 = arith.constant 0 : index
    %c0_1 = arith.constant 0 : index
    %3 = vector.load %arg8[%c0, %c0_1] : memref<256x128xf32, #tpu.memory_space<vmem>>, vector<256x128xf32>
    %c0_2 = arith.constant 0 : index
    %c0_3 = arith.constant 0 : index
    %4 = vector.load %arg2[%c0_2, %c0_3] : memref<256x256xbf16, #tpu.memory_space<vmem>>, vector<256x256xbf16>
    %c0_4 = arith.constant 0 : index
    %c0_5 = arith.constant 0 : index
    %5 = vector.load %arg3[%c0_4, %c0_5] : memref<256x128xbf16, #tpu.memory_space<vmem>>, vector<256x128xbf16>
    %cst = arith.constant dense<0.000000e+00> : vector<256x128xf32>
    %6 = tpu.matmul %4, %5, %cst {dimension_numbers = #tpu.dot_dimension_numbers<[1], [0], [0], [1], [0, 0, 1, 1], [], []>} : vector<256x256xbf16>, vector<256x128xbf16>, vector<256x128xf32> -> vector<256x128xf32>
    %7 = arith.addf %3, %6 : vector<256x128xf32>
    %c0_6 = arith.constant 0 : index
    %c0_7 = arith.constant 0 : index
    %8 = vector.load %arg8[%c0_6, %c0_7] : memref<256x128xf32, #tpu.memory_space<vmem>>, vector<256x128xf32>
    tpu.vector_store %arg8[%c0_6, %c0_7], %7 {strides = array<i32>} : memref<256x128xf32, #tpu.memory_space<vmem>>, vector<256x128xf32>,
    %c0_i32_8 = arith.constant 0 : i32
    %9 = arith.cmpi eq, %arg1, %c0_i32_8 : i32
    %10 = arith.extui %9 : i1 to i32
    %c0_i32_9 = arith.constant 0 : i32
    %11 = arith.cmpi ne, %10, %c0_i32_9 : i32
    scf.if %11 {
      %c0_10 = arith.constant 0 : index
      %c0_11 = arith.constant 0 : index
      %12 = vector.load %arg8[%c0_10, %c0_11] : memref<256x128xf32, #tpu.memory_space<vmem>>, vector<256x128xf32>
      %13 = arith.truncf %12 : vector<256x128xf32> to vector<256x128xbf16>
      %c0_12 = arith.constant 0 : index
      %c0_13 = arith.constant 0 : index
      %14 = vector.load %arg4[%c0_12, %c0_13] : memref<128x128xbf16, #tpu.memory_space<vmem>>, vector<128x128xbf16>
      %cst_14 = arith.constant dense<0.000000e+00> : vector<256x128xf32>
      %15 = tpu.matmul %13, %14, %cst_14 {dimension_numbers = #tpu.dot_dimension_numbers<[1], [0], [0], [1], [0, 0, 1, 1], [], []>} : vector<256x128xbf16>, vector<128x128xbf16>, vector<256x128xf32> -> vector<256x128xf32>
      %cst_15 = arith.constant 0.000000e+00 : f32
      %16 = vector.broadcast %cst_15 : f32 to vector<256x128xf32>
      %17 = arith.maximumf %15, %16 : vector<256x128xf32>
      %18 = arith.truncf %17 : vector<256x128xf32> to vector<256x128xbf16>
      %c0_16 = arith.constant 0 : index
      %c0_17 = arith.constant 0 : index
      %19 = vector.load %arg5[%c0_16, %c0_17] : memref<128x128xbf16, #tpu.memory_space<vmem>>, vector<128x128xbf16>
      %cst_18 = arith.constant dense<0.000000e+00> : vector<256x128xf32>
      %20 = tpu.matmul %18, %19, %cst_18 {dimension_numbers = #tpu.dot_dimension_numbers<[1], [0], [0], [1], [0, 0, 1, 1], [], []>} : vector<256x128xbf16>, vector<128x128xbf16>, vector<256x128xf32> -> vector<256x128xf32>
      %cst_19 = arith.constant 0.000000e+00 : f32
      %21 = vector.broadcast %cst_19 : f32 to vector<256x128xf32>
      %22 = arith.maximumf %20, %21 : vector<256x128xf32>
      %23 = arith.truncf %22 : vector<256x128xf32> to vector<256x128xbf16>
      %c0_20 = arith.constant 0 : index
      %c0_21 = arith.constant 0 : index
      %24 = vector.load %arg6[%c0_20, %c0_21] : memref<128x128xbf16, #tpu.memory_space<vmem>>, vector<128x128xbf16>
      %cst_22 = arith.constant dense<0.000000e+00> : vector<256x128xf32>
      %25 = tpu.matmul %23, %24, %cst_22 {dimension_numbers = #tpu.dot_dimension_numbers<[1], [0], [0], [1], [0, 0, 1, 1], [], []>} : vector<256x128xbf16>, vector<128x128xbf16>, vector<256x128xf32> -> vector<256x128xf32>
      %c0_23 = arith.constant 0 : index
      %c0_24 = arith.constant 0 : index
      %26 = vector.load %arg7[%c0_23, %c0_24] : memref<256x128xf32, #tpu.memory_space<vmem>>, vector<256x128xf32>
      tpu.vector_store %arg7[%c0_23, %c0_24], %25 {strides = array<i32>} : memref<256x128xf32, #tpu.memory_space<vmem>>, vector<256x128xf32>,
    } else {
    }
    return
  }
  func.func @transform_0(%arg0: i32, %arg1: i32) -> (i32, i32) {
    %c0_i32 = arith.constant 0 : i32
    return %arg0, %arg1 : i32, i32
  }
  func.func @transform_1(%arg0: i32, %arg1: i32) -> (i32, i32) {
    %c0_i32 = arith.constant 0 : i32
    %c0_i32_0 = arith.constant 0 : i32
    return %arg1, %c0_i32 : i32, i32
  }
  func.func @transform_2(%arg0: i32, %arg1: i32) -> (i32, i32) {
    %c0_i32 = arith.constant 0 : i32
    %c0_i32_0 = arith.constant 0 : i32
    %c0_i32_1 = arith.constant 0 : i32
    return %c0_i32, %c0_i32_0 : i32, i32
  }
  func.func @transform_3(%arg0: i32, %arg1: i32) -> (i32, i32) {
    %c0_i32 = arith.constant 0 : i32
    %c0_i32_0 = arith.constant 0 : i32
    %c0_i32_1 = arith.constant 0 : i32
    return %c0_i32, %c0_i32_0 : i32, i32
  }
  func.func @transform_4(%arg0: i32, %arg1: i32) -> (i32, i32) {
    %c0_i32 = arith.constant 0 : i32
    %c0_i32_0 = arith.constant 0 : i32
    %c0_i32_1 = arith.constant 0 : i32
    return %c0_i32, %c0_i32_0 : i32, i32
  }
  func.func @transform_5(%arg0: i32, %arg1: i32) -> (i32, i32) {
    %c0_i32 = arith.constant 0 : i32
    %c0_i32_0 = arith.constant 0 : i32
    return %arg0, %c0_i32 : i32, i32
  }
}

</mosaic_0001>

<llo_original>
// kernel: mlppool_forward.1
$region0: #{mlppool_forward.1}
  #allocation0 [shape = 'u32[]', space=smem, size = 0x4, offset = 0x4, fixed_abs, tag = 'smem constant byte address 0x4 - core index']
  #allocation1 [shape = 'u32[72,128]{1,0:T(1,128)}', space=vmem, size = 0x9000, scoped, tag = 'internal scratch']
  #allocation2 [shape = 'f32[256,128]{1,0:T(8,128)}', space=vmem, size = 0x20000, scoped, tag = 'scratch operand']
  %s0 = inlined_call_operand.vmem [shape: bf16[256,256], index: 0, kind: input, shape index: {}]
  %s1 = inlined_call_operand.vmem [shape: bf16[256,128], index: 1, kind: input, shape index: {}]
  %s2 = inlined_call_operand.vmem [shape: bf16[128,128], index: 2, kind: input, shape index: {}]
  %s3 = inlined_call_operand.vmem [shape: bf16[128,128], index: 3, kind: input, shape index: {}]
  %s4 = inlined_call_operand.vmem [shape: bf16[128,128], index: 4, kind: input, shape index: {}]
  %s5 = inlined_call_operand.vmem [shape: f32[256,128], index: 5, kind: output, shape index: {}]
  %s6 = sld [smem:[#allocation0]]
  $region38: #{mlppool_forward.1} parent=0
    _
  %s8 = ssub.s32 1, %s6
  %s9 = scalar_select 0, %s8, %s6
  // Predicated region
  $region2: #{mlppool_forward.1} parent=0 // pred_check
    _
  $region3: #{mlppool_forward.1} parent=0 // pred_check_branch
    %11 = sbr.rel (0) target = $region5
  $region4: #{mlppool_forward.1} parent=0 // pred_region
    _
  $region5: #{mlppool_forward.1} parent=0 // pred_fallthru
    _
  // Predicated region
  $region6: #{mlppool_forward.1} parent=0 // pred_check
    _
  $region7: #{mlppool_forward.1} parent=0 // pred_check_branch
    %13 = sbr.rel (0) target = $region9
  $region8: #{mlppool_forward.1} parent=0 // pred_region
    _
  $region9: #{mlppool_forward.1} parent=0 // pred_fallthru
    _
  // Predicated region
  $region10: #{mlppool_forward.1} parent=0 // pred_check
    _
  $region11: #{mlppool_forward.1} parent=0 // pred_check_branch
    %15 = sbr.rel (0) target = $region13
  $region12: #{mlppool_forward.1} parent=0 // pred_region
    _
  $region13: #{mlppool_forward.1} parent=0 // pred_fallthru
    _
  // Predicated region
  $region14: #{mlppool_forward.1} parent=0 // pred_check
    _
  $region15: #{mlppool_forward.1} parent=0 // pred_check_branch
    %17 = sbr.rel (0) target = $region17
  $region16: #{mlppool_forward.1} parent=0 // pred_region
    _
  $region17: #{mlppool_forward.1} parent=0 // pred_fallthru
    _
  // Predicated region
  $region18: #{mlppool_forward.1} parent=0 // pred_check
    _
  $region19: #{mlppool_forward.1} parent=0 // pred_check_branch
    %19 = sbr.rel (0) target = $region21
  $region20: #{mlppool_forward.1} parent=0 // pred_region
    _
  $region21: #{mlppool_forward.1} parent=0 // pred_fallthru
    _
  %p20 = scmp.eq.s32.totalorder 0, 0
  // Predicated region
  $region22: #{mlppool_forward.1} parent=0 // pred_check
    %p21 = pneg %p20
  $region23: #{mlppool_forward.1} parent=0 // pred_check_branch
    %23 = sbr.rel (%p21) target = $region25
  $region24: #{mlppool_forward.1} parent=0 // pred_region
    %24 = vst [vmem:[#allocation2] sm:$0xff] 0.0
    %25 = vst [vmem:[#allocation2 + $0x8] sm:$0xff] 0.0
    %26 = vst [vmem:[#allocation2 + $0x10] sm:$0xff] 0.0
    %27 = vst [vmem:[#allocation2 + $0x18] sm:$0xff] 0.0
    %28 = vst [vmem:[#allocation2 + $0x20] sm:$0xff] 0.0
    %29 = vst [vmem:[#allocation2 + $0x28] sm:$0xff] 0.0
    %30 = vst [vmem:[#allocation2 + $0x30] sm:$0xff] 0.0
    %31 = vst [vmem:[#allocation2 + $0x38] sm:$0xff] 0.0
    %32 = vst [vmem:[#allocation2 + $0x40] sm:$0xff] 0.0
    %33 = vst [vmem:[#allocation2 + $0x48] sm:$0xff] 0.0
    %34 = vst [vmem:[#allocation2 + $0x50] sm:$0xff] 0.0
    %35 = vst [vmem:[#allocation2 + $0x58] sm:$0xff] 0.0
    %36 = vst [vmem:[#allocation2 + $0x60] sm:$0xff] 0.0
    %37 = vst [vmem:[#allocation2 + $0x68] sm:$0xff] 0.0
    %38 = vst [vmem:[#allocation2 + $0x70] sm:$0xff] 0.0
    %39 = vst [vmem:[#allocation2 + $0x78] sm:$0xff] 0.0
    %40 = vst [vmem:[#allocation2 + $0x80] sm:$0xff] 0.0
    %41 = vst [vmem:[#allocation2 + $0x88] sm:$0xff] 0.0
    %42 = vst [vmem:[#allocation2 + $0x90] sm:$0xff] 0.0
    %43 = vst [vmem:[#allocation2 + $0x98] sm:$0xff] 0.0
    %44 = vst [vmem:[#allocation2 + $0xa0] sm:$0xff] 0.0
    %45 = vst [vmem:[#allocation2 + $0xa8] sm:$0xff] 0.0
    %46 = vst [vmem:[#allocation2 + $0xb0] sm:$0xff] 0.0
    %47 = vst [vmem:[#allocation2 + $0xb8] sm:$0xff] 0.0
    %48 = vst [vmem:[#allocation2 + $0xc0] sm:$0xff] 0.0
    %49 = vst [vmem:[#allocation2 + $0xc8] sm:$0xff] 0.0
    %50 = vst [vmem:[#allocation2 + $0xd0] sm:$0xff] 0.0
    %51 = vst [vmem:[#allocation2 + $0xd8] sm:$0xff] 0.0
    %52 = vst [vmem:[#allocation2 + $0xe0] sm:$0xff] 0.0
    %53 = vst [vmem:[#allocation2 + $0xe8] sm:$0xff] 0.0
    %54 = vst [vmem:[#allocation2 + $0xf0] sm:$0xff] 0.0
    %55 = vst [vmem:[#allocation2 + $0xf8] sm:$0xff] 0.0
  $region25: #{mlppool_forward.1} parent=0 // pred_fallthru
    _
  %v56 = vld [vmem:[#allocation2] sm:$0xff]
  %v57 = vld [vmem:[#allocation2 + $0x8] sm:$0xff]
  %v58 = vld [vmem:[#allocation2 + $0x10] sm:$0xff]
  %v59 = vld [vmem:[#allocation2 + $0x18] sm:$0xff]
  %v60 = vld [vmem:[#allocation2 + $0x20] sm:$0xff]
  %v61 = vld [vmem:[#allocation2 + $0x28] sm:$0xff]
  %v62 = vld [vmem:[#allocation2 + $0x30] sm:$0xff]
  %v63 = vld [vmem:[#allocation2 + $0x38] sm:$0xff]
  %v64 = vld [vmem:[#allocation2 + $0x40] sm:$0xff]
  %v65 = vld [vmem:[#allocation2 + $0x48] sm:$0xff]
  %v66 = vld [vmem:[#allocation2 + $0x50] sm:$0xff]
  %v67 = vld [vmem:[#allocation2 + $0x58] sm:$0xff]
  %v68 = vld [vmem:[#allocation2 + $0x60] sm:$0xff]
  %v69 = vld [vmem:[#allocation2 + $0x68] sm:$0xff]
  %v70 = vld [vmem:[#allocation2 + $0x70] sm:$0xff]
  %v71 = vld [vmem:[#allocation2 + $0x78] sm:$0xff]
  %v72 = vld [vmem:[#allocation2 + $0x80] sm:$0xff]
  %v73 = vld [vmem:[#allocation2 + $0x88] sm:$0xff]
  %v74 = vld [vmem:[#allocation2 + $0x90] sm:$0xff]
  %v75 = vld [vmem:[#allocation2 + $0x98] sm:$0xff]
  %v76 = vld [vmem:[#allocation2 + $0xa0] sm:$0xff]
  %v77 = vld [vmem:[#allocation2 + $0xa8] sm:$0xff]
  %v78 = vld [vmem:[#allocation2 + $0xb0] sm:$0xff]
  %v79 = vld [vmem:[#allocation2 + $0xb8] sm:$0xff]
  %v80 = vld [vmem:[#allocation2 + $0xc0] sm:$0xff]
  %v81 = vld [vmem:[#allocation2 + $0xc8] sm:$0xff]
  %v82 = vld [vmem:[#allocation2 + $0xd0] sm:$0xff]
  %v83 = vld [vmem:[#allocation2 + $0xd8] sm:$0xff]
  %v84 = vld [vmem:[#allocation2 + $0xe0] sm:$0xff]
  %v85 = vld [vmem:[#allocation2 + $0xe8] sm:$0xff]
  %v86 = vld [vmem:[#allocation2 + $0xf0] sm:$0xff]
  %v87 = vld [vmem:[#allocation2 + $0xf8] sm:$0xff]
  %v88 = vld [vmem:[%s0] sm:$0xff]
  %v89 = vld [vmem:[%s0 + $0x8] sm:$0xff]
  %v90 = vld [vmem:[%s0 + $0x10] sm:$0xff]
  %v91 = vld [vmem:[%s0 + $0x18] sm:$0xff]
  %v92 = vld [vmem:[%s0 + $0x20] sm:$0xff]
  %v93 = vld [vmem:[%s0 + $0x28] sm:$0xff]
  %v94 = vld [vmem:[%s0 + $0x30] sm:$0xff]
  %v95 = vld [vmem:[%s0 + $0x38] sm:$0xff]
  %v96 = vld [vmem:[%s0 + $0x40] sm:$0xff]
  %v97 = vld [vmem:[%s0 + $0x48] sm:$0xff]
  %v98 = vld [vmem:[%s0 + $0x50] sm:$0xff]
  %v99 = vld [vmem:[%s0 + $0x58] sm:$0xff]
  %v100 = vld [vmem:[%s0 + $0x60] sm:$0xff]
  %v101 = vld [vmem:[%s0 + $0x68] sm:$0xff]
  %v102 = vld [vmem:[%s0 + $0x70] sm:$0xff]
  %v103 = vld [vmem:[%s0 + $0x78] sm:$0xff]
  %v104 = vld [vmem:[%s0 + $0x80] sm:$0xff]
  %v105 = vld [vmem:[%s0 + $0x88] sm:$0xff]
  %v106 = vld [vmem:[%s0 + $0x90] sm:$0xff]
  %v107 = vld [vmem:[%s0 + $0x98] sm:$0xff]
  %v108 = vld [vmem:[%s0 + $0xa0] sm:$0xff]
  %v109 = vld [vmem:[%s0 + $0xa8] sm:$0xff]
  %v110 = vld [vmem:[%s0 + $0xb0] sm:$0xff]
  %v111 = vld [vmem:[%s0 + $0xb8] sm:$0xff]
  %v112 = vld [vmem:[%s0 + $0xc0] sm:$0xff]
  %v113 = vld [vmem:[%s0 + $0xc8] sm:$0xff]
  %v114 = vld [vmem:[%s0 + $0xd0] sm:$0xff]
  %v115 = vld [vmem:[%s0 + $0xd8] sm:$0xff]
  %v116 = vld [vmem:[%s0 + $0xe0] sm:$0xff]
  %v117 = vld [vmem:[%s0 + $0xe8] sm:$0xff]
  %v118 = vld [vmem:[%s0 + $0xf0] sm:$0xff]
  %v119 = vld [vmem:[%s0 + $0xf8] sm:$0xff]
  %v120 = vld [vmem:[%s1] sm:$0xf]
  %v121 = vld [vmem:[%s1 + $0x4] sm:$0xf]
  %v122 = vld [vmem:[%s1 + $0x8] sm:$0xf]
  %v123 = vld [vmem:[%s1 + $0xc] sm:$0xf]
  %v124 = vld [vmem:[%s1 + $0x10] sm:$0xf]
  %v125 = vld [vmem:[%s1 + $0x14] sm:$0xf]
  %v126 = vld [vmem:[%s1 + $0x18] sm:$0xf]
  %v127 = vld [vmem:[%s1 + $0x1c] sm:$0xf]
  %v128 = vld [vmem:[%s1 + $0x20] sm:$0xf]
  %v129 = vld [vmem:[%s1 + $0x24] sm:$0xf]
  %v130 = vld [vmem:[%s1 + $0x28] sm:$0xf]
  %v131 = vld [vmem:[%s1 + $0x2c] sm:$0xf]
  %v132 = vld [vmem:[%s1 + $0x30] sm:$0xf]
  %v133 = vld [vmem:[%s1 + $0x34] sm:$0xf]
  %v134 = vld [vmem:[%s1 + $0x38] sm:$0xf]
  %v135 = vld [vmem:[%s1 + $0x3c] sm:$0xf]
  %v136 = vld [vmem:[%s1 + $0x40] sm:$0xf]
  %v137 = vld [vmem:[%s1 + $0x44] sm:$0xf]
  %v138 = vld [vmem:[%s1 + $0x48] sm:$0xf]
  %v139 = vld [vmem:[%s1 + $0x4c] sm:$0xf]
  %v140 = vld [vmem:[%s1 + $0x50] sm:$0xf]
  %v141 = vld [vmem:[%s1 + $0x54] sm:$0xf]
  %v142 = vld [vmem:[%s1 + $0x58] sm:$0xf]
  %v143 = vld [vmem:[%s1 + $0x5c] sm:$0xf]
  %v144 = vld [vmem:[%s1 + $0x60] sm:$0xf]
  %v145 = vld [vmem:[%s1 + $0x64] sm:$0xf]
  %v146 = vld [vmem:[%s1 + $0x68] sm:$0xf]
  %v147 = vld [vmem:[%s1 + $0x6c] sm:$0xf]
  %v148 = vld [vmem:[%s1 + $0x70] sm:$0xf]
  %v149 = vld [vmem:[%s1 + $0x74] sm:$0xf]
  %v150 = vld [vmem:[%s1 + $0x78] sm:$0xf]
  %v151 = vld [vmem:[%s1 + $0x7c] sm:$0xf]
  %v184 = vunpack.c.l.b16 %v88
  %v185 = vunpack.c.h.b16 %v88
  %v186 = vunpack.c.l.b16 %v89
  %v187 = vunpack.c.h.b16 %v89
  %v188 = vunpack.c.l.b16 %v90
  %v189 = vunpack.c.h.b16 %v90
  %v190 = vunpack.c.l.b16 %v91
  %v191 = vunpack.c.h.b16 %v91
  %v192 = vunpack.c.l.b16 %v92
  %v193 = vunpack.c.h.b16 %v92
  %v194 = vunpack.c.l.b16 %v93
  %v195 = vunpack.c.h.b16 %v93
  %v196 = vunpack.c.l.b16 %v94
  %v197 = vunpack.c.h.b16 %v94
  %v198 = vunpack.c.l.b16 %v95
  %v199 = vunpack.c.h.b16 %v95
  %v200 = vunpack.c.l.b16 %v96
  %v201 = vunpack.c.h.b16 %v96
  %v202 = vunpack.c.l.b16 %v97
  %v203 = vunpack.c.h.b16 %v97
  %v204 = vunpack.c.l.b16 %v98
  %v205 = vunpack.c.h.b16 %v98
  %v206 = vunpack.c.l.b16 %v99
  %v207 = vunpack.c.h.b16 %v99
  %v208 = vunpack.c.l.b16 %v100
  %v209 = vunpack.c.h.b16 %v100
  %v210 = vunpack.c.l.b16 %v101
  %v211 = vunpack.c.h.b16 %v101
  %v212 = vunpack.c.l.b16 %v102
  %v213 = vunpack.c.h.b16 %v102
  %v214 = vunpack.c.l.b16 %v103
  %v215 = vunpack.c.h.b16 %v103
  %v216 = vunpack.c.l.b16 %v104
  %v217 = vunpack.c.h.b16 %v104
  %v218 = vunpack.c.l.b16 %v105
  %v219 = vunpack.c.h.b16 %v105
  %v220 = vunpack.c.l.b16 %v106
  %v221 = vunpack.c.h.b16 %v106
  %v222 = vunpack.c.l.b16 %v107
  %v223 = vunpack.c.h.b16 %v107
  %v224 = vunpack.c.l.b16 %v108
  %v225 = vunpack.c.h.b16 %v108
  %v226 = vunpack.c.l.b16 %v109
  %v227 = vunpack.c.h.b16 %v109
  %v228 = vunpack.c.l.b16 %v110
  %v229 = vunpack.c.h.b16 %v110
  %v230 = vunpack.c.l.b16 %v111
  %v231 = vunpack.c.h.b16 %v111
  %v232 = vunpack.c.l.b16 %v112
  %v233 = vunpack.c.h.b16 %v112
  %v234 = vunpack.c.l.b16 %v113
  %v235 = vunpack.c.h.b16 %v113
  %v236 = vunpack.c.l.b16 %v114
  %v237 = vunpack.c.h.b16 %v114
  %v238 = vunpack.c.l.b16 %v115
  %v239 = vunpack.c.h.b16 %v115
  %v240 = vunpack.c.l.b16 %v116
  %v241 = vunpack.c.h.b16 %v116
  %v242 = vunpack.c.l.b16 %v117
  %v243 = vunpack.c.h.b16 %v117
  %v244 = vunpack.c.l.b16 %v118
  %v245 = vunpack.c.h.b16 %v118
  %v246 = vunpack.c.l.b16 %v119
  %v247 = vunpack.c.h.b16 %v119
  %v248 = vpack.c.b16 %v186, %v184
  %v249 = vpack.c.b16 %v187, %v185
  %v250 = vpack.c.b16 %v190, %v188
  %v251 = vpack.c.b16 %v191, %v189
  %v252 = vpack.c.b16 %v194, %v192
  %v253 = vpack.c.b16 %v195, %v193
  %v254 = vpack.c.b16 %v198, %v196
  %v255 = vpack.c.b16 %v199, %v197
  %v256 = vpack.c.b16 %v202, %v200
  %v257 = vpack.c.b16 %v203, %v201
  %v258 = vpack.c.b16 %v206, %v204
  %v259 = vpack.c.b16 %v207, %v205
  %v260 = vpack.c.b16 %v210, %v208
  %v261 = vpack.c.b16 %v211, %v209
  %v262 = vpack.c.b16 %v214, %v212
  %v263 = vpack.c.b16 %v215, %v213
  %v264 = vpack.c.b16 %v218, %v216
  %v265 = vpack.c.b16 %v219, %v217
  %v266 = vpack.c.b16 %v222, %v220
  %v267 = vpack.c.b16 %v223, %v221
  %v268 = vpack.c.b16 %v226, %v224
  %v269 = vpack.c.b16 %v227, %v225
  %v270 = vpack.c.b16 %v230, %v228
  %v271 = vpack.c.b16 %v231, %v229
  %v272 = vpack.c.b16 %v234, %v232
  %v273 = vpack.c.b16 %v235, %v233
  %v274 = vpack.c.b16 %v238, %v236
  %v275 = vpack.c.b16 %v239, %v237
  %v276 = vpack.c.b16 %v242, %v240
  %v277 = vpack.c.b16 %v243, %v241
  %v278 = vpack.c.b16 %v246, %v244
  %v279 = vpack.c.b16 %v247, %v245
  %v344 = vunpack.c.l.b16 %v120
  %v345 = vunpack.c.l.b16 %v121
  %v346 = vunpack.c.l.b16 %v122
  %v347 = vunpack.c.l.b16 %v123
  %v348 = vunpack.c.l.b16 %v124
  %v349 = vunpack.c.l.b16 %v125
  %v350 = vunpack.c.l.b16 %v126
  %v351 = vunpack.c.l.b16 %v127
  %v352 = vunpack.c.l.b16 %v128
  %v353 = vunpack.c.l.b16 %v129
  %v354 = vunpack.c.l.b16 %v130
  %v355 = vunpack.c.l.b16 %v131
  %v356 = vunpack.c.l.b16 %v132
  %v357 = vunpack.c.l.b16 %v133
  %v358 = vunpack.c.l.b16 %v134
  %v359 = vunpack.c.l.b16 %v135
  %v360 = vunpack.c.l.b16 %v136
  %v361 = vunpack.c.l.b16 %v137
  %v362 = vunpack.c.l.b16 %v138
  %v363 = vunpack.c.l.b16 %v139
  %v364 = vunpack.c.l.b16 %v140
  %v365 = vunpack.c.l.b16 %v141
  %v366 = vunpack.c.l.b16 %v142
  %v367 = vunpack.c.l.b16 %v143
  %v368 = vunpack.c.l.b16 %v144
  %v369 = vunpack.c.l.b16 %v145
  %v370 = vunpack.c.l.b16 %v146
  %v371 = vunpack.c.l.b16 %v147
  %v372 = vunpack.c.l.b16 %v148
  %v373 = vunpack.c.l.b16 %v149
  %v374 = vunpack.c.l.b16 %v150
  %v375 = vunpack.c.l.b16 %v151
  %v376 = vpack.c.b16 %v345, %v344
  %v377 = vpack.c.b16 %v347, %v346
  %v378 = vpack.c.b16 %v349, %v348
  %v379 = vpack.c.b16 %v351, %v350
  %v380 = vpack.c.b16 %v353, %v352
  %v381 = vpack.c.b16 %v355, %v354
  %v382 = vpack.c.b16 %v357, %v356
  %v383 = vpack.c.b16 %v359, %v358
  %v384 = vpack.c.b16 %v361, %v360
  %v385 = vpack.c.b16 %v363, %v362
  %v386 = vpack.c.b16 %v365, %v364
  %v387 = vpack.c.b16 %v367, %v366
  %v388 = vpack.c.b16 %v369, %v368
  %v389 = vpack.c.b16 %v371, %v370
  %v390 = vpack.c.b16 %v373, %v372
  %v391 = vpack.c.b16 %v375, %v374
  %408 = vmatpush.bf16.msra.mxu0 %v383
  %409 = vmatpush.bf16.msra.mxu0 %v382
  %410 = vmatpush.bf16.msra.mxu0 %v381
  %411 = vmatpush.bf16.msra.mxu0 %v380
  %412 = vmatpush.bf16.msra.mxu0 %v379
  %413 = vmatpush.bf16.msra.mxu0 %v378
  %414 = vmatpush.bf16.msra.mxu0 %v377
  %415 = vmatpush.bf16.msra.mxu0 %v376
  %416 = vmatmul.bf16.gmra.mxu0 %v248
  %v417 = vpop.f32.mrf.mxu0
  %v418 = vadd.f32 0.0, %v417
  %v419 = vpop.f32.mrf.mxu0
  %v420 = vadd.f32 0.0, %v419
  %421 = vmatmul.bf16.gmra.mxu0 %v250
  %v422 = vpop.f32.mrf.mxu0
  %v423 = vadd.f32 0.0, %v422
  %v424 = vpop.f32.mrf.mxu0
  %v425 = vadd.f32 0.0, %v424
  %426 = vmatmul.bf16.gmra.mxu0 %v252
  %v427 = vpop.f32.mrf.mxu0
  %v428 = vadd.f32 0.0, %v427
  %v429 = vpop.f32.mrf.mxu0
  %v430 = vadd.f32 0.0, %v429
  %431 = vmatmul.bf16.gmra.mxu0 %v254
  %v432 = vpop.f32.mrf.mxu0
  %v433 = vadd.f32 0.0, %v432
  %v434 = vpop.f32.mrf.mxu0
  %v435 = vadd.f32 0.0, %v434
  %436 = vmatmul.bf16.gmra.mxu0 %v256
  %v437 = vpop.f32.mrf.mxu0
  %v438 = vadd.f32 0.0, %v437
  %v439 = vpop.f32.mrf.mxu0
  %v440 = vadd.f32 0.0, %v439
  %441 = vmatmul.bf16.gmra.mxu0 %v258
  %v442 = vpop.f32.mrf.mxu0
  %v443 = vadd.f32 0.0, %v442
  %v444 = vpop.f32.mrf.mxu0
  %v445 = vadd.f32 0.0, %v444
  %446 = vmatmul.bf16.gmra.mxu0 %v260
  %v447 = vpop.f32.mrf.mxu0
  %v448 = vadd.f32 0.0, %v447
  %v449 = vpop.f32.mrf.mxu0
  %v450 = vadd.f32 0.0, %v449
  %451 = vmatmul.bf16.gmra.mxu0 %v262
  %v452 = vpop.f32.mrf.mxu0
  %v453 = vadd.f32 0.0, %v452
  %v454 = vpop.f32.mrf.mxu0
  %v455 = vadd.f32 0.0, %v454
  %456 = vmatmul.bf16.gmra.mxu0 %v264
  %v457 = vpop.f32.mrf.mxu0
  %v458 = vadd.f32 0.0, %v457
  %v459 = vpop.f32.mrf.mxu0
  %v460 = vadd.f32 0.0, %v459
  %461 = vmatmul.bf16.gmra.mxu0 %v266
  %v462 = vpop.f32.mrf.mxu0
  %v463 = vadd.f32 0.0, %v462
  %v464 = vpop.f32.mrf.mxu0
  %v465 = vadd.f32 0.0, %v464
  %466 = vmatmul.bf16.gmra.mxu0 %v268
  %v467 = vpop.f32.mrf.mxu0
  %v468 = vadd.f32 0.0, %v467
  %v469 = vpop.f32.mrf.mxu0
  %v470 = vadd.f32 0.0, %v469
  %471 = vmatmul.bf16.gmra.mxu0 %v270
  %v472 = vpop.f32.mrf.mxu0
  %v473 = vadd.f32 0.0, %v472
  %v474 = vpop.f32.mrf.mxu0
  %v475 = vadd.f32 0.0, %v474
  %476 = vmatmul.bf16.gmra.mxu0 %v272
  %v477 = vpop.f32.mrf.mxu0
  %v478 = vadd.f32 0.0, %v477
  %v479 = vpop.f32.mrf.mxu0
  %v480 = vadd.f32 0.0, %v479
  %481 = vmatmul.bf16.gmra.mxu0 %v274
  %v482 = vpop.f32.mrf.mxu0
  %v483 = vadd.f32 0.0, %v482
  %v484 = vpop.f32.mrf.mxu0
  %v485 = vadd.f32 0.0, %v484
  %486 = vmatmul.bf16.gmra.mxu0 %v276
  %v487 = vpop.f32.mrf.mxu0
  %v488 = vadd.f32 0.0, %v487
  %v489 = vpop.f32.mrf.mxu0
  %v490 = vadd.f32 0.0, %v489
  %491 = vmatmul.bf16.gmra.mxu0 %v278
  %v492 = vpop.f32.mrf.mxu0
  %v493 = vadd.f32 0.0, %v492
  %v494 = vpop.f32.mrf.mxu0
  %v495 = vadd.f32 0.0, %v494
  %496 = vdwg.mxu0
  %497 = vmatpush.bf16.msra.mxu0 %v391
  %498 = vmatpush.bf16.msra.mxu0 %v390
  %499 = vmatpush.bf16.msra.mxu0 %v389
  %500 = vmatpush.bf16.msra.mxu0 %v388
  %501 = vmatpush.bf16.msra.mxu0 %v387
  %502 = vmatpush.bf16.msra.mxu0 %v386
  %503 = vmatpush.bf16.msra.mxu0 %v385
  %504 = vmatpush.bf16.msra.mxu0 %v384
  %505 = vmatmul.bf16.gmra.mxu0 %v249
  %v506 = vpop.f32.mrf.mxu0
  %v507 = vadd.f32 %v418, %v506
  %v508 = vpop.f32.mrf.mxu0
  %v509 = vadd.f32 %v420, %v508
  %510 = vmatmul.bf16.gmra.mxu0 %v251
  %v511 = vpop.f32.mrf.mxu0
  %v512 = vadd.f32 %v423, %v511
  %v513 = vpop.f32.mrf.mxu0
  %v514 = vadd.f32 %v425, %v513
  %515 = vmatmul.bf16.gmra.mxu0 %v253
  %v516 = vpop.f32.mrf.mxu0
  %v517 = vadd.f32 %v428, %v516
  %v518 = vpop.f32.mrf.mxu0
  %v519 = vadd.f32 %v430, %v518
  %520 = vmatmul.bf16.gmra.mxu0 %v255
  %v521 = vpop.f32.mrf.mxu0
  %v522 = vadd.f32 %v433, %v521
  %v523 = vpop.f32.mrf.mxu0
  %v524 = vadd.f32 %v435, %v523
  %525 = vmatmul.bf16.gmra.mxu0 %v257
  %v526 = vpop.f32.mrf.mxu0
  %v527 = vadd.f32 %v438, %v526
  %v528 = vpop.f32.mrf.mxu0
  %v529 = vadd.f32 %v440, %v528
  %530 = vmatmul.bf16.gmra.mxu0 %v259
  %v531 = vpop.f32.mrf.mxu0
  %v532 = vadd.f32 %v443, %v531
  %v533 = vpop.f32.mrf.mxu0
  %v534 = vadd.f32 %v445, %v533
  %535 = vmatmul.bf16.gmra.mxu0 %v261
  %v536 = vpop.f32.mrf.mxu0
  %v537 = vadd.f32 %v448, %v536
  %v538 = vpop.f32.mrf.mxu0
  %v539 = vadd.f32 %v450, %v538
  %540 = vmatmul.bf16.gmra.mxu0 %v263
  %v541 = vpop.f32.mrf.mxu0
  %v542 = vadd.f32 %v453, %v541
  %v543 = vpop.f32.mrf.mxu0
  %v544 = vadd.f32 %v455, %v543
  %545 = vmatmul.bf16.gmra.mxu0 %v265
  %v546 = vpop.f32.mrf.mxu0
  %v547 = vadd.f32 %v458, %v546
  %v548 = vpop.f32.mrf.mxu0
  %v549 = vadd.f32 %v460, %v548
  %550 = vmatmul.bf16.gmra.mxu0 %v267
  %v551 = vpop.f32.mrf.mxu0
  %v552 = vadd.f32 %v463, %v551
  %v553 = vpop.f32.mrf.mxu0
  %v554 = vadd.f32 %v465, %v553
  %555 = vmatmul.bf16.gmra.mxu0 %v269
  %v556 = vpop.f32.mrf.mxu0
  %v557 = vadd.f32 %v468, %v556
  %v558 = vpop.f32.mrf.mxu0
  %v559 = vadd.f32 %v470, %v558
  %560 = vmatmul.bf16.gmra.mxu0 %v271
  %v561 = vpop.f32.mrf.mxu0
  %v562 = vadd.f32 %v473, %v561
  %v563 = vpop.f32.mrf.mxu0
  %v564 = vadd.f32 %v475, %v563
  %565 = vmatmul.bf16.gmra.mxu0 %v273
  %v566 = vpop.f32.mrf.mxu0
  %v567 = vadd.f32 %v478, %v566
  %v568 = vpop.f32.mrf.mxu0
  %v569 = vadd.f32 %v480, %v568
  %570 = vmatmul.bf16.gmra.mxu0 %v275
  %v571 = vpop.f32.mrf.mxu0
  %v572 = vadd.f32 %v483, %v571
  %v573 = vpop.f32.mrf.mxu0
  %v574 = vadd.f32 %v485, %v573
  %575 = vmatmul.bf16.gmra.mxu0 %v277
  %v576 = vpop.f32.mrf.mxu0
  %v577 = vadd.f32 %v488, %v576
  %v578 = vpop.f32.mrf.mxu0
  %v579 = vadd.f32 %v490, %v578
  %580 = vmatmul.bf16.gmra.mxu0 %v279
  %v581 = vpop.f32.mrf.mxu0
  %v582 = vadd.f32 %v493, %v581
  %v583 = vpop.f32.mrf.mxu0
  %v584 = vadd.f32 %v495, %v583
  %585 = vdwg.mxu0
  %v586 = vadd.f32 %v56, %v507
  %v587 = vadd.f32 %v57, %v509
  %v588 = vadd.f32 %v58, %v512
  %v589 = vadd.f32 %v59, %v514
  %v590 = vadd.f32 %v60, %v517
  %v591 = vadd.f32 %v61, %v519
  %v592 = vadd.f32 %v62, %v522
  %v593 = vadd.f32 %v63, %v524
  %v594 = vadd.f32 %v64, %v527
  %v595 = vadd.f32 %v65, %v529
  %v596 = vadd.f32 %v66, %v532
  %v597 = vadd.f32 %v67, %v534
  %v598 = vadd.f32 %v68, %v537
  %v599 = vadd.f32 %v69, %v539
  %v600 = vadd.f32 %v70, %v542
  %v601 = vadd.f32 %v71, %v544
  %v602 = vadd.f32 %v72, %v547
  %v603 = vadd.f32 %v73, %v549
  %v604 = vadd.f32 %v74, %v552
  %v605 = vadd.f32 %v75, %v554
  %v606 = vadd.f32 %v76, %v557
  %v607 = vadd.f32 %v77, %v559
  %v608 = vadd.f32 %v78, %v562
  %v609 = vadd.f32 %v79, %v564
  %v610 = vadd.f32 %v80, %v567
  %v611 = vadd.f32 %v81, %v569
  %v612 = vadd.f32 %v82, %v572
  %v613 = vadd.f32 %v83, %v574
  %v614 = vadd.f32 %v84, %v577
  %v615 = vadd.f32 %v85, %v579
  %v616 = vadd.f32 %v86, %v582
  %v617 = vadd.f32 %v87, %v584
  %618 = vst [vmem:[#allocation2] sm:$0xff] %v586
  %619 = vst [vmem:[#allocation2 + $0x8] sm:$0xff] %v587
  %620 = vst [vmem:[#allocation2 + $0x10] sm:$0xff] %v588
  %621 = vst [vmem:[#allocation2 + $0x18] sm:$0xff] %v589
  %622 = vst [vmem:[#allocation2 + $0x20] sm:$0xff] %v590
  %623 = vst [vmem:[#allocation2 + $0x28] sm:$0xff] %v591
  %624 = vst [vmem:[#allocation2 + $0x30] sm:$0xff] %v592
  %625 = vst [vmem:[#allocation2 + $0x38] sm:$0xff] %v593
  %626 = vst [vmem:[#allocation2 + $0x40] sm:$0xff] %v594
  %627 = vst [vmem:[#allocation2 + $0x48] sm:$0xff] %v595
  %628 = vst [vmem:[#allocation2 + $0x50] sm:$0xff] %v596
  %629 = vst [vmem:[#allocation2 + $0x58] sm:$0xff] %v597
  %630 = vst [vmem:[#allocation2 + $0x60] sm:$0xff] %v598
  %631 = vst [vmem:[#allocation2 + $0x68] sm:$0xff] %v599
  %632 = vst [vmem:[#allocation2 + $0x70] sm:$0xff] %v600
  %633 = vst [vmem:[#allocation2 + $0x78] sm:$0xff] %v601
  %634 = vst [vmem:[#allocation2 + $0x80] sm:$0xff] %v602
  %635 = vst [vmem:[#allocation2 + $0x88] sm:$0xff] %v603
  %636 = vst [vmem:[#allocation2 + $0x90] sm:$0xff] %v604
  %637 = vst [vmem:[#allocation2 + $0x98] sm:$0xff] %v605
  %638 = vst [vmem:[#allocation2 + $0xa0] sm:$0xff] %v606
  %639 = vst [vmem:[#allocation2 + $0xa8] sm:$0xff] %v607
  %640 = vst [vmem:[#allocation2 + $0xb0] sm:$0xff] %v608
  %641 = vst [vmem:[#allocation2 + $0xb8] sm:$0xff] %v609
  %642 = vst [vmem:[#allocation2 + $0xc0] sm:$0xff] %v610
  %643 = vst [vmem:[#allocation2 + $0xc8] sm:$0xff] %v611
  %644 = vst [vmem:[#allocation2 + $0xd0] sm:$0xff] %v612
  %645 = vst [vmem:[#allocation2 + $0xd8] sm:$0xff] %v613
  %646 = vst [vmem:[#allocation2 + $0xe0] sm:$0xff] %v614
  %647 = vst [vmem:[#allocation2 + $0xe8] sm:$0xff] %v615
  %648 = vst [vmem:[#allocation2 + $0xf0] sm:$0xff] %v616
  %649 = vst [vmem:[#allocation2 + $0xf8] sm:$0xff] %v617
  // Predicated region
  $region26: #{mlppool_forward.1} parent=0 // pred_check
    %p650 = pneg %p20
  $region27: #{mlppool_forward.1} parent=0 // pred_check_branch
    %652 = sbr.rel (%p650) target = $region29
  $region28: #{mlppool_forward.1} parent=0 // pred_region
    %v653 = vld [vmem:[#allocation2] sm:$0xff]
    %v654 = vld [vmem:[#allocation2 + $0x8] sm:$0xff]
    %v655 = vld [vmem:[#allocation2 + $0x10] sm:$0xff]
    %v656 = vld [vmem:[#allocation2 + $0x18] sm:$0xff]
    %v657 = vld [vmem:[#allocation2 + $0x20] sm:$0xff]
    %v658 = vld [vmem:[#allocation2 + $0x28] sm:$0xff]
    %v659 = vld [vmem:[#allocation2 + $0x30] sm:$0xff]
    %v660 = vld [vmem:[#allocation2 + $0x38] sm:$0xff]
    %v661 = vld [vmem:[#allocation2 + $0x40] sm:$0xff]
    %v662 = vld [vmem:[#allocation2 + $0x48] sm:$0xff]
    %v663 = vld [vmem:[#allocation2 + $0x50] sm:$0xff]
    %v664 = vld [vmem:[#allocation2 + $0x58] sm:$0xff]
    %v665 = vld [vmem:[#allocation2 + $0x60] sm:$0xff]
    %v666 = vld [vmem:[#allocation2 + $0x68] sm:$0xff]
    %v667 = vld [vmem:[#allocation2 + $0x70] sm:$0xff]
    %v668 = vld [vmem:[#allocation2 + $0x78] sm:$0xff]
    %v669 = vld [vmem:[#allocation2 + $0x80] sm:$0xff]
    %v670 = vld [vmem:[#allocation2 + $0x88] sm:$0xff]
    %v671 = vld [vmem:[#allocation2 + $0x90] sm:$0xff]
    %v672 = vld [vmem:[#allocation2 + $0x98] sm:$0xff]
    %v673 = vld [vmem:[#allocation2 + $0xa0] sm:$0xff]
    %v674 = vld [vmem:[#allocation2 + $0xa8] sm:$0xff]
    %v675 = vld [vmem:[#allocation2 + $0xb0] sm:$0xff]
    %v676 = vld [vmem:[#allocation2 + $0xb8] sm:$0xff]
    %v677 = vld [vmem:[#allocation2 + $0xc0] sm:$0xff]
    %v678 = vld [vmem:[#allocation2 + $0xc8] sm:$0xff]
    %v679 = vld [vmem:[#allocation2 + $0xd0] sm:$0xff]
    %v680 = vld [vmem:[#allocation2 + $0xd8] sm:$0xff]
    %v681 = vld [vmem:[#allocation2 + $0xe0] sm:$0xff]
    %v682 = vld [vmem:[#allocation2 + $0xe8] sm:$0xff]
    %v683 = vld [vmem:[#allocation2 + $0xf0] sm:$0xff]
    %v684 = vld [vmem:[#allocation2 + $0xf8] sm:$0xff]
    %v685 = vpack.c.bf16 %v654, %v653
    %v686 = vpack.c.bf16 %v656, %v655
    %v687 = vpack.c.bf16 %v658, %v657
    %v688 = vpack.c.bf16 %v660, %v659
    %v689 = vpack.c.bf16 %v662, %v661
    %v690 = vpack.c.bf16 %v664, %v663
    %v691 = vpack.c.bf16 %v666, %v665
    %v692 = vpack.c.bf16 %v668, %v667
    %v693 = vpack.c.bf16 %v670, %v669
    %v694 = vpack.c.bf16 %v672, %v671
    %v695 = vpack.c.bf16 %v674, %v673
    %v696 = vpack.c.bf16 %v676, %v675
    %v697 = vpack.c.bf16 %v678, %v677
    %v698 = vpack.c.bf16 %v680, %v679
    %v699 = vpack.c.bf16 %v682, %v681
    %v700 = vpack.c.bf16 %v684, %v683
    %v701 = vld [vmem:[%s2] sm:$0xf]
    %v702 = vld [vmem:[%s2 + $0x4] sm:$0xf]
    %v703 = vld [vmem:[%s2 + $0x8] sm:$0xf]
    %v704 = vld [vmem:[%s2 + $0xc] sm:$0xf]
    %v705 = vld [vmem:[%s2 + $0x10] sm:$0xf]
    %v706 = vld [vmem:[%s2 + $0x14] sm:$0xf]
    %v707 = vld [vmem:[%s2 + $0x18] sm:$0xf]
    %v708 = vld [vmem:[%s2 + $0x1c] sm:$0xf]
    %v709 = vld [vmem:[%s2 + $0x20] sm:$0xf]
    %v710 = vld [vmem:[%s2 + $0x24] sm:$0xf]
    %v711 = vld [vmem:[%s2 + $0x28] sm:$0xf]
    %v712 = vld [vmem:[%s2 + $0x2c] sm:$0xf]
    %v713 = vld [vmem:[%s2 + $0x30] sm:$0xf]
    %v714 = vld [vmem:[%s2 + $0x34] sm:$0xf]
    %v715 = vld [vmem:[%s2 + $0x38] sm:$0xf]
    %v716 = vld [vmem:[%s2 + $0x3c] sm:$0xf]
    %v733 = vunpack.c.l.b16 %v701
    %v734 = vunpack.c.l.b16 %v702
    %v735 = vunpack.c.l.b16 %v703
    %v736 = vunpack.c.l.b16 %v704
    %v737 = vunpack.c.l.b16 %v705
    %v738 = vunpack.c.l.b16 %v706
    %v739 = vunpack.c.l.b16 %v707
    %v740 = vunpack.c.l.b16 %v708
    %v741 = vunpack.c.l.b16 %v709
    %v742 = vunpack.c.l.b16 %v710
    %v743 = vunpack.c.l.b16 %v711
    %v744 = vunpack.c.l.b16 %v712
    %v745 = vunpack.c.l.b16 %v713
    %v746 = vunpack.c.l.b16 %v714
    %v747 = vunpack.c.l.b16 %v715
    %v748 = vunpack.c.l.b16 %v716
    %v749 = vpack.c.b16 %v734, %v733
    %v750 = vpack.c.b16 %v736, %v735
    %v751 = vpack.c.b16 %v738, %v737
    %v752 = vpack.c.b16 %v740, %v739
    %v753 = vpack.c.b16 %v742, %v741
    %v754 = vpack.c.b16 %v744, %v743
    %v755 = vpack.c.b16 %v746, %v745
    %v756 = vpack.c.b16 %v748, %v747
    %765 = vmatpush.bf16.msra.mxu0 %v756
    %766 = vmatpush.bf16.msra.mxu0 %v755
    %767 = vmatpush.bf16.msra.mxu0 %v754
    %768 = vmatpush.bf16.msra.mxu0 %v753
    %769 = vmatpush.bf16.msra.mxu0 %v752
    %770 = vmatpush.bf16.msra.mxu0 %v751
    %771 = vmatpush.bf16.msra.mxu0 %v750
    %772 = vmatpush.bf16.msra.mxu0 %v749
    %773 = vmatmul.bf16.gmra.mxu0 %v685
    %v774 = vpop.f32.mrf.mxu0
    %v775 = vadd.f32 0.0, %v774
    %v776 = vpop.f32.mrf.mxu0
    %v777 = vadd.f32 0.0, %v776
    %778 = vmatmul.bf16.gmra.mxu0 %v686
    %v779 = vpop.f32.mrf.mxu0
    %v780 = vadd.f32 0.0, %v779
    %v781 = vpop.f32.mrf.mxu0
    %v782 = vadd.f32 0.0, %v781
    %783 = vmatmul.bf16.gmra.mxu0 %v687
    %v784 = vpop.f32.mrf.mxu0
    %v785 = vadd.f32 0.0, %v784
    %v786 = vpop.f32.mrf.mxu0
    %v787 = vadd.f32 0.0, %v786
    %788 = vmatmul.bf16.gmra.mxu0 %v688
    %v789 = vpop.f32.mrf.mxu0
    %v790 = vadd.f32 0.0, %v789
    %v791 = vpop.f32.mrf.mxu0
    %v792 = vadd.f32 0.0, %v791
    %793 = vmatmul.bf16.gmra.mxu0 %v689
    %v794 = vpop.f32.mrf.mxu0
    %v795 = vadd.f32 0.0, %v794
    %v796 = vpop.f32.mrf.mxu0
    %v797 = vadd.f32 0.0, %v796
    %798 = vmatmul.bf16.gmra.mxu0 %v690
    %v799 = vpop.f32.mrf.mxu0
    %v800 = vadd.f32 0.0, %v799
    %v801 = vpop.f32.mrf.mxu0
    %v802 = vadd.f32 0.0, %v801
    %803 = vmatmul.bf16.gmra.mxu0 %v691
    %v804 = vpop.f32.mrf.mxu0
    %v805 = vadd.f32 0.0, %v804
    %v806 = vpop.f32.mrf.mxu0
    %v807 = vadd.f32 0.0, %v806
    %808 = vmatmul.bf16.gmra.mxu0 %v692
    %v809 = vpop.f32.mrf.mxu0
    %v810 = vadd.f32 0.0, %v809
    %v811 = vpop.f32.mrf.mxu0
    %v812 = vadd.f32 0.0, %v811
    %813 = vmatmul.bf16.gmra.mxu0 %v693
    %v814 = vpop.f32.mrf.mxu0
    %v815 = vadd.f32 0.0, %v814
    %v816 = vpop.f32.mrf.mxu0
    %v817 = vadd.f32 0.0, %v816
    %818 = vmatmul.bf16.gmra.mxu0 %v694
    %v819 = vpop.f32.mrf.mxu0
    %v820 = vadd.f32 0.0, %v819
    %v821 = vpop.f32.mrf.mxu0
    %v822 = vadd.f32 0.0, %v821
    %823 = vmatmul.bf16.gmra.mxu0 %v695
    %v824 = vpop.f32.mrf.mxu0
    %v825 = vadd.f32 0.0, %v824
    %v826 = vpop.f32.mrf.mxu0
    %v827 = vadd.f32 0.0, %v826
    %828 = vmatmul.bf16.gmra.mxu0 %v696
    %v829 = vpop.f32.mrf.mxu0
    %v830 = vadd.f32 0.0, %v829
    %v831 = vpop.f32.mrf.mxu0
    %v832 = vadd.f32 0.0, %v831
    %833 = vmatmul.bf16.gmra.mxu0 %v697
    %v834 = vpop.f32.mrf.mxu0
    %v835 = vadd.f32 0.0, %v834
    %v836 = vpop.f32.mrf.mxu0
    %v837 = vadd.f32 0.0, %v836
    %838 = vmatmul.bf16.gmra.mxu0 %v698
    %v839 = vpop.f32.mrf.mxu0
    %v840 = vadd.f32 0.0, %v839
    %v841 = vpop.f32.mrf.mxu0
    %v842 = vadd.f32 0.0, %v841
    %843 = vmatmul.bf16.gmra.mxu0 %v699
    %v844 = vpop.f32.mrf.mxu0
    %v845 = vadd.f32 0.0, %v844
    %v846 = vpop.f32.mrf.mxu0
    %v847 = vadd.f32 0.0, %v846
    %848 = vmatmul.bf16.gmra.mxu0 %v700
    %v849 = vpop.f32.mrf.mxu0
    %v850 = vadd.f32 0.0, %v849
    %v851 = vpop.f32.mrf.mxu0
    %v852 = vadd.f32 0.0, %v851
    %853 = vdwg.mxu0
    %v854 = vmax.f32 %v775, 0.0
    %v855 = vmax.f32 %v777, 0.0
    %v856 = vmax.f32 %v780, 0.0
    %v857 = vmax.f32 %v782, 0.0
    %v858 = vmax.f32 %v785, 0.0
    %v859 = vmax.f32 %v787, 0.0
    %v860 = vmax.f32 %v790, 0.0
    %v861 = vmax.f32 %v792, 0.0
    %v862 = vmax.f32 %v795, 0.0
    %v863 = vmax.f32 %v797, 0.0
    %v864 = vmax.f32 %v800, 0.0
    %v865 = vmax.f32 %v802, 0.0
    %v866 = vmax.f32 %v805, 0.0
    %v867 = vmax.f32 %v807, 0.0
    %v868 = vmax.f32 %v810, 0.0
    %v869 = vmax.f32 %v812, 0.0
    %v870 = vmax.f32 %v815, 0.0
    %v871 = vmax.f32 %v817, 0.0
    %v872 = vmax.f32 %v820, 0.0
    %v873 = vmax.f32 %v822, 0.0
    %v874 = vmax.f32 %v825, 0.0
    %v875 = vmax.f32 %v827, 0.0
    %v876 = vmax.f32 %v830, 0.0
    %v877 = vmax.f32 %v832, 0.0
    %v878 = vmax.f32 %v835, 0.0
    %v879 = vmax.f32 %v837, 0.0
    %v880 = vmax.f32 %v840, 0.0
    %v881 = vmax.f32 %v842, 0.0
    %v882 = vmax.f32 %v845, 0.0
    %v883 = vmax.f32 %v847, 0.0
    %v884 = vmax.f32 %v850, 0.0
    %v885 = vmax.f32 %v852, 0.0
    %v886 = vpack.c.bf16 %v855, %v854
    %v887 = vpack.c.bf16 %v857, %v856
    %v888 = vpack.c.bf16 %v859, %v858
    %v889 = vpack.c.bf16 %v861, %v860
    %v890 = vpack.c.bf16 %v863, %v862
    %v891 = vpack.c.bf16 %v865, %v864
    %v892 = vpack.c.bf16 %v867, %v866
    %v893 = vpack.c.bf16 %v869, %v868
    %v894 = vpack.c.bf16 %v871, %v870
    %v895 = vpack.c.bf16 %v873, %v872
    %v896 = vpack.c.bf16 %v875, %v874
    %v897 = vpack.c.bf16 %v877, %v876
    %v898 = vpack.c.bf16 %v879, %v878
    %v899 = vpack.c.bf16 %v881, %v880
    %v900 = vpack.c.bf16 %v883, %v882
    %v901 = vpack.c.bf16 %v885, %v884
    %v902 = vld [vmem:[%s3] sm:$0xf]
    %v903 = vld [vmem:[%s3 + $0x4] sm:$0xf]
    %v904 = vld [vmem:[%s3 + $0x8] sm:$0xf]
    %v905 = vld [vmem:[%s3 + $0xc] sm:$0xf]
    %v906 = vld [vmem:[%s3 + $0x10] sm:$0xf]
    %v907 = vld [vmem:[%s3 + $0x14] sm:$0xf]
    %v908 = vld [vmem:[%s3 + $0x18] sm:$0xf]
    %v909 = vld [vmem:[%s3 + $0x1c] sm:$0xf]
    %v910 = vld [vmem:[%s3 + $0x20] sm:$0xf]
    %v911 = vld [vmem:[%s3 + $0x24] sm:$0xf]
    %v912 = vld [vmem:[%s3 + $0x28] sm:$0xf]
    %v913 = vld [vmem:[%s3 + $0x2c] sm:$0xf]
    %v914 = vld [vmem:[%s3 + $0x30] sm:$0xf]
    %v915 = vld [vmem:[%s3 + $0x34] sm:$0xf]
    %v916 = vld [vmem:[%s3 + $0x38] sm:$0xf]
    %v917 = vld [vmem:[%s3 + $0x3c] sm:$0xf]
    %v934 = vunpack.c.l.b16 %v902
    %v935 = vunpack.c.l.b16 %v903
    %v936 = vunpack.c.l.b16 %v904
    %v937 = vunpack.c.l.b16 %v905
    %v938 = vunpack.c.l.b16 %v906
    %v939 = vunpack.c.l.b16 %v907
    %v940 = vunpack.c.l.b16 %v908
    %v941 = vunpack.c.l.b16 %v909
    %v942 = vunpack.c.l.b16 %v910
    %v943 = vunpack.c.l.b16 %v911
    %v944 = vunpack.c.l.b16 %v912
    %v945 = vunpack.c.l.b16 %v913
    %v946 = vunpack.c.l.b16 %v914
    %v947 = vunpack.c.l.b16 %v915
    %v948 = vunpack.c.l.b16 %v916
    %v949 = vunpack.c.l.b16 %v917
    %v950 = vpack.c.b16 %v935, %v934
    %v951 = vpack.c.b16 %v937, %v936
    %v952 = vpack.c.b16 %v939, %v938
    %v953 = vpack.c.b16 %v941, %v940
    %v954 = vpack.c.b16 %v943, %v942
    %v955 = vpack.c.b16 %v945, %v944
    %v956 = vpack.c.b16 %v947, %v946
    %v957 = vpack.c.b16 %v949, %v948
    %966 = vmatpush.bf16.msra.mxu0 %v957
    %967 = vmatpush.bf16.msra.mxu0 %v956
    %968 = vmatpush.bf16.msra.mxu0 %v955
    %969 = vmatpush.bf16.msra.mxu0 %v954
    %970 = vmatpush.bf16.msra.mxu0 %v953
    %971 = vmatpush.bf16.msra.mxu0 %v952
    %972 = vmatpush.bf16.msra.mxu0 %v951
    %973 = vmatpush.bf16.msra.mxu0 %v950
    %974 = vmatmul.bf16.gmra.mxu0 %v886
    %v975 = vpop.f32.mrf.mxu0
    %v976 = vadd.f32 0.0, %v975
    %v977 = vpop.f32.mrf.mxu0
    %v978 = vadd.f32 0.0, %v977
    %979 = vmatmul.bf16.gmra.mxu0 %v887
    %v980 = vpop.f32.mrf.mxu0
    %v981 = vadd.f32 0.0, %v980
    %v982 = vpop.f32.mrf.mxu0
    %v983 = vadd.f32 0.0, %v982
    %984 = vmatmul.bf16.gmra.mxu0 %v888
    %v985 = vpop.f32.mrf.mxu0
    %v986 = vadd.f32 0.0, %v985
    %v987 = vpop.f32.mrf.mxu0
    %v988 = vadd.f32 0.0, %v987
    %989 = vmatmul.bf16.gmra.mxu0 %v889
    %v990 = vpop.f32.mrf.mxu0
    %v991 = vadd.f32 0.0, %v990
    %v992 = vpop.f32.mrf.mxu0
    %v993 = vadd.f32 0.0, %v992
    %994 = vmatmul.bf16.gmra.mxu0 %v890
    %v995 = vpop.f32.mrf.mxu0
    %v996 = vadd.f32 0.0, %v995
    %v997 = vpop.f32.mrf.mxu0
    %v998 = vadd.f32 0.0, %v997
    %999 = vmatmul.bf16.gmra.mxu0 %v891
    %v1000 = vpop.f32.mrf.mxu0
    %v1001 = vadd.f32 0.0, %v1000
    %v1002 = vpop.f32.mrf.mxu0
    %v1003 = vadd.f32 0.0, %v1002
    %1004 = vmatmul.bf16.gmra.mxu0 %v892
    %v1005 = vpop.f32.mrf.mxu0
    %v1006 = vadd.f32 0.0, %v1005
    %v1007 = vpop.f32.mrf.mxu0
    %v1008 = vadd.f32 0.0, %v1007
    %1009 = vmatmul.bf16.gmra.mxu0 %v893
    %v1010 = vpop.f32.mrf.mxu0
    %v1011 = vadd.f32 0.0, %v1010
    %v1012 = vpop.f32.mrf.mxu0
    %v1013 = vadd.f32 0.0, %v1012
    %1014 = vmatmul.bf16.gmra.mxu0 %v894
    %v1015 = vpop.f32.mrf.mxu0
    %v1016 = vadd.f32 0.0, %v1015
    %v1017 = vpop.f32.mrf.mxu0
    %v1018 = vadd.f32 0.0, %v1017
    %1019 = vmatmul.bf16.gmra.mxu0 %v895
    %v1020 = vpop.f32.mrf.mxu0
    %v1021 = vadd.f32 0.0, %v1020
    %v1022 = vpop.f32.mrf.mxu0
    %v1023 = vadd.f32 0.0, %v1022
    %1024 = vmatmul.bf16.gmra.mxu0 %v896
    %v1025 = vpop.f32.mrf.mxu0
    %v1026 = vadd.f32 0.0, %v1025
    %v1027 = vpop.f32.mrf.mxu0
    %v1028 = vadd.f32 0.0, %v1027
    %1029 = vmatmul.bf16.gmra.mxu0 %v897
    %v1030 = vpop.f32.mrf.mxu0
    %v1031 = vadd.f32 0.0, %v1030
    %v1032 = vpop.f32.mrf.mxu0
    %v1033 = vadd.f32 0.0, %v1032
    %1034 = vmatmul.bf16.gmra.mxu0 %v898
    %v1035 = vpop.f32.mrf.mxu0
    %v1036 = vadd.f32 0.0, %v1035
    %v1037 = vpop.f32.mrf.mxu0
    %v1038 = vadd.f32 0.0, %v1037
    %1039 = vmatmul.bf16.gmra.mxu0 %v899
    %v1040 = vpop.f32.mrf.mxu0
    %v1041 = vadd.f32 0.0, %v1040
    %v1042 = vpop.f32.mrf.mxu0
    %v1043 = vadd.f32 0.0, %v1042
    %1044 = vmatmul.bf16.gmra.mxu0 %v900
    %v1045 = vpop.f32.mrf.mxu0
    %v1046 = vadd.f32 0.0, %v1045
    %v1047 = vpop.f32.mrf.mxu0
    %v1048 = vadd.f32 0.0, %v1047
    %1049 = vmatmul.bf16.gmra.mxu0 %v901
    %v1050 = vpop.f32.mrf.mxu0
    %v1051 = vadd.f32 0.0, %v1050
    %v1052 = vpop.f32.mrf.mxu0
    %v1053 = vadd.f32 0.0, %v1052
    %1054 = vdwg.mxu0
    %v1055 = vmax.f32 %v976, 0.0
    %v1056 = vmax.f32 %v978, 0.0
    %v1057 = vmax.f32 %v981, 0.0
    %v1058 = vmax.f32 %v983, 0.0
    %v1059 = vmax.f32 %v986, 0.0
    %v1060 = vmax.f32 %v988, 0.0
    %v1061 = vmax.f32 %v991, 0.0
    %v1062 = vmax.f32 %v993, 0.0
    %v1063 = vmax.f32 %v996, 0.0
    %v1064 = vmax.f32 %v998, 0.0
    %v1065 = vmax.f32 %v1001, 0.0
    %v1066 = vmax.f32 %v1003, 0.0
    %v1067 = vmax.f32 %v1006, 0.0
    %v1068 = vmax.f32 %v1008, 0.0
    %v1069 = vmax.f32 %v1011, 0.0
    %v1070 = vmax.f32 %v1013, 0.0
    %v1071 = vmax.f32 %v1016, 0.0
    %v1072 = vmax.f32 %v1018, 0.0
    %v1073 = vmax.f32 %v1021, 0.0
    %v1074 = vmax.f32 %v1023, 0.0
    %v1075 = vmax.f32 %v1026, 0.0
    %v1076 = vmax.f32 %v1028, 0.0
    %v1077 = vmax.f32 %v1031, 0.0
    %v1078 = vmax.f32 %v1033, 0.0
    %v1079 = vmax.f32 %v1036, 0.0
    %v1080 = vmax.f32 %v1038, 0.0
    %v1081 = vmax.f32 %v1041, 0.0
    %v1082 = vmax.f32 %v1043, 0.0
    %v1083 = vmax.f32 %v1046, 0.0
    %v1084 = vmax.f32 %v1048, 0.0
    %v1085 = vmax.f32 %v1051, 0.0
    %v1086 = vmax.f32 %v1053, 0.0
    %v1087 = vpack.c.bf16 %v1056, %v1055
    %v1088 = vpack.c.bf16 %v1058, %v1057
    %v1089 = vpack.c.bf16 %v1060, %v1059
    %v1090 = vpack.c.bf16 %v1062, %v1061
    %v1091 = vpack.c.bf16 %v1064, %v1063
    %v1092 = vpack.c.bf16 %v1066, %v1065
    %v1093 = vpack.c.bf16 %v1068, %v1067
    %v1094 = vpack.c.bf16 %v1070, %v1069
    %v1095 = vpack.c.bf16 %v1072, %v1071
    %v1096 = vpack.c.bf16 %v1074, %v1073
    %v1097 = vpack.c.bf16 %v1076, %v1075
    %v1098 = vpack.c.bf16 %v1078, %v1077
    %v1099 = vpack.c.bf16 %v1080, %v1079
    %v1100 = vpack.c.bf16 %v1082, %v1081
    %v1101 = vpack.c.bf16 %v1084, %v1083
    %v1102 = vpack.c.bf16 %v1086, %v1085
    %v1103 = vld [vmem:[%s4] sm:$0xf]
    %v1104 = vld [vmem:[%s4 + $0x4] sm:$0xf]
    %v1105 = vld [vmem:[%s4 + $0x8] sm:$0xf]
    %v1106 = vld [vmem:[%s4 + $0xc] sm:$0xf]
    %v1107 = vld [vmem:[%s4 + $0x10] sm:$0xf]
    %v1108 = vld [vmem:[%s4 + $0x14] sm:$0xf]
    %v1109 = vld [vmem:[%s4 + $0x18] sm:$0xf]
    %v1110 = vld [vmem:[%s4 + $0x1c] sm:$0xf]
    %v1111 = vld [vmem:[%s4 + $0x20] sm:$0xf]
    %v1112 = vld [vmem:[%s4 + $0x24] sm:$0xf]
    %v1113 = vld [vmem:[%s4 + $0x28] sm:$0xf]
    %v1114 = vld [vmem:[%s4 + $0x2c] sm:$0xf]
    %v1115 = vld [vmem:[%s4 + $0x30] sm:$0xf]
    %v1116 = vld [vmem:[%s4 + $0x34] sm:$0xf]
    %v1117 = vld [vmem:[%s4 + $0x38] sm:$0xf]
    %v1118 = vld [vmem:[%s4 + $0x3c] sm:$0xf]
    %v1135 = vunpack.c.l.b16 %v1103
    %v1136 = vunpack.c.l.b16 %v1104
    %v1137 = vunpack.c.l.b16 %v1105
    %v1138 = vunpack.c.l.b16 %v1106
    %v1139 = vunpack.c.l.b16 %v1107
    %v1140 = vunpack.c.l.b16 %v1108
    %v1141 = vunpack.c.l.b16 %v1109
    %v1142 = vunpack.c.l.b16 %v1110
    %v1143 = vunpack.c.l.b16 %v1111
    %v1144 = vunpack.c.l.b16 %v1112
    %v1145 = vunpack.c.l.b16 %v1113
    %v1146 = vunpack.c.l.b16 %v1114
    %v1147 = vunpack.c.l.b16 %v1115
    %v1148 = vunpack.c.l.b16 %v1116
    %v1149 = vunpack.c.l.b16 %v1117
    %v1150 = vunpack.c.l.b16 %v1118
    %v1151 = vpack.c.b16 %v1136, %v1135
    %v1152 = vpack.c.b16 %v1138, %v1137
    %v1153 = vpack.c.b16 %v1140, %v1139
    %v1154 = vpack.c.b16 %v1142, %v1141
    %v1155 = vpack.c.b16 %v1144, %v1143
    %v1156 = vpack.c.b16 %v1146, %v1145
    %v1157 = vpack.c.b16 %v1148, %v1147
    %v1158 = vpack.c.b16 %v1150, %v1149
    %1167 = vmatpush.bf16.msra.mxu0 %v1158
    %1168 = vmatpush.bf16.msra.mxu0 %v1157
    %1169 = vmatpush.bf16.msra.mxu0 %v1156
    %1170 = vmatpush.bf16.msra.mxu0 %v1155
    %1171 = vmatpush.bf16.msra.mxu0 %v1154
    %1172 = vmatpush.bf16.msra.mxu0 %v1153
    %1173 = vmatpush.bf16.msra.mxu0 %v1152
    %1174 = vmatpush.bf16.msra.mxu0 %v1151
    %1175 = vmatmul.bf16.gmra.mxu0 %v1087
    %v1176 = vpop.f32.mrf.mxu0
    %v1177 = vadd.f32 0.0, %v1176
    %v1178 = vpop.f32.mrf.mxu0
    %v1179 = vadd.f32 0.0, %v1178
    %1180 = vmatmul.bf16.gmra.mxu0 %v1088
    %v1181 = vpop.f32.mrf.mxu0
    %v1182 = vadd.f32 0.0, %v1181
    %v1183 = vpop.f32.mrf.mxu0
    %v1184 = vadd.f32 0.0, %v1183
    %1185 = vmatmul.bf16.gmra.mxu0 %v1089
    %v1186 = vpop.f32.mrf.mxu0
    %v1187 = vadd.f32 0.0, %v1186
    %v1188 = vpop.f32.mrf.mxu0
    %v1189 = vadd.f32 0.0, %v1188
    %1190 = vmatmul.bf16.gmra.mxu0 %v1090
    %v1191 = vpop.f32.mrf.mxu0
    %v1192 = vadd.f32 0.0, %v1191
    %v1193 = vpop.f32.mrf.mxu0
    %v1194 = vadd.f32 0.0, %v1193
    %1195 = vmatmul.bf16.gmra.mxu0 %v1091
    %v1196 = vpop.f32.mrf.mxu0
    %v1197 = vadd.f32 0.0, %v1196
    %v1198 = vpop.f32.mrf.mxu0
    %v1199 = vadd.f32 0.0, %v1198
    %1200 = vmatmul.bf16.gmra.mxu0 %v1092
    %v1201 = vpop.f32.mrf.mxu0
    %v1202 = vadd.f32 0.0, %v1201
    %v1203 = vpop.f32.mrf.mxu0
    %v1204 = vadd.f32 0.0, %v1203
    %1205 = vmatmul.bf16.gmra.mxu0 %v1093
    %v1206 = vpop.f32.mrf.mxu0
    %v1207 = vadd.f32 0.0, %v1206
    %v1208 = vpop.f32.mrf.mxu0
    %v1209 = vadd.f32 0.0, %v1208
    %1210 = vmatmul.bf16.gmra.mxu0 %v1094
    %v1211 = vpop.f32.mrf.mxu0
    %v1212 = vadd.f32 0.0, %v1211
    %v1213 = vpop.f32.mrf.mxu0
    %v1214 = vadd.f32 0.0, %v1213
    %1215 = vmatmul.bf16.gmra.mxu0 %v1095
    %v1216 = vpop.f32.mrf.mxu0
    %v1217 = vadd.f32 0.0, %v1216
    %v1218 = vpop.f32.mrf.mxu0
    %v1219 = vadd.f32 0.0, %v1218
    %1220 = vmatmul.bf16.gmra.mxu0 %v1096
    %v1221 = vpop.f32.mrf.mxu0
    %v1222 = vadd.f32 0.0, %v1221
    %v1223 = vpop.f32.mrf.mxu0
    %v1224 = vadd.f32 0.0, %v1223
    %1225 = vmatmul.bf16.gmra.mxu0 %v1097
    %v1226 = vpop.f32.mrf.mxu0
    %v1227 = vadd.f32 0.0, %v1226
    %v1228 = vpop.f32.mrf.mxu0
    %v1229 = vadd.f32 0.0, %v1228
    %1230 = vmatmul.bf16.gmra.mxu0 %v1098
    %v1231 = vpop.f32.mrf.mxu0
    %v1232 = vadd.f32 0.0, %v1231
    %v1233 = vpop.f32.mrf.mxu0
    %v1234 = vadd.f32 0.0, %v1233
    %1235 = vmatmul.bf16.gmra.mxu0 %v1099
    %v1236 = vpop.f32.mrf.mxu0
    %v1237 = vadd.f32 0.0, %v1236
    %v1238 = vpop.f32.mrf.mxu0
    %v1239 = vadd.f32 0.0, %v1238
    %1240 = vmatmul.bf16.gmra.mxu0 %v1100
    %v1241 = vpop.f32.mrf.mxu0
    %v1242 = vadd.f32 0.0, %v1241
    %v1243 = vpop.f32.mrf.mxu0
    %v1244 = vadd.f32 0.0, %v1243
    %1245 = vmatmul.bf16.gmra.mxu0 %v1101
    %v1246 = vpop.f32.mrf.mxu0
    %v1247 = vadd.f32 0.0, %v1246
    %v1248 = vpop.f32.mrf.mxu0
    %v1249 = vadd.f32 0.0, %v1248
    %1250 = vmatmul.bf16.gmra.mxu0 %v1102
    %v1251 = vpop.f32.mrf.mxu0
    %v1252 = vadd.f32 0.0, %v1251
    %v1253 = vpop.f32.mrf.mxu0
    %v1254 = vadd.f32 0.0, %v1253
    %1255 = vdwg.mxu0
    %1256 = vst [vmem:[%s5] sm:$0xff] %v1177
    %1257 = vst [vmem:[%s5 + $0x8] sm:$0xff] %v1179
    %1258 = vst [vmem:[%s5 + $0x10] sm:$0xff] %v1182
    %1259 = vst [vmem:[%s5 + $0x18] sm:$0xff] %v1184
    %1260 = vst [vmem:[%s5 + $0x20] sm:$0xff] %v1187
    %1261 = vst [vmem:[%s5 + $0x28] sm:$0xff] %v1189
    %1262 = vst [vmem:[%s5 + $0x30] sm:$0xff] %v1192
    %1263 = vst [vmem:[%s5 + $0x38] sm:$0xff] %v1194
    %1264 = vst [vmem:[%s5 + $0x40] sm:$0xff] %v1197
    %1265 = vst [vmem:[%s5 + $0x48] sm:$0xff] %v1199
    %1266 = vst [vmem:[%s5 + $0x50] sm:$0xff] %v1202
    %1267 = vst [vmem:[%s5 + $0x58] sm:$0xff] %v1204
    %1268 = vst [vmem:[%s5 + $0x60] sm:$0xff] %v1207
    %1269 = vst [vmem:[%s5 + $0x68] sm:$0xff] %v1209
    %1270 = vst [vmem:[%s5 + $0x70] sm:$0xff] %v1212
    %1271 = vst [vmem:[%s5 + $0x78] sm:$0xff] %v1214
    %1272 = vst [vmem:[%s5 + $0x80] sm:$0xff] %v1217
    %1273 = vst [vmem:[%s5 + $0x88] sm:$0xff] %v1219
    %1274 = vst [vmem:[%s5 + $0x90] sm:$0xff] %v1222
    %1275 = vst [vmem:[%s5 + $0x98] sm:$0xff] %v1224
    %1276 = vst [vmem:[%s5 + $0xa0] sm:$0xff] %v1227
    %1277 = vst [vmem:[%s5 + $0xa8] sm:$0xff] %v1229
    %1278 = vst [vmem:[%s5 + $0xb0] sm:$0xff] %v1232
    %1279 = vst [vmem:[%s5 + $0xb8] sm:$0xff] %v1234
    %1280 = vst [vmem:[%s5 + $0xc0] sm:$0xff] %v1237
    %1281 = vst [vmem:[%s5 + $0xc8] sm:$0xff] %v1239
    %1282 = vst [vmem:[%s5 + $0xd0] sm:$0xff] %v1242
    %1283 = vst [vmem:[%s5 + $0xd8] sm:$0xff] %v1244
    %1284 = vst [vmem:[%s5 + $0xe0] sm:$0xff] %v1247
    %1285 = vst [vmem:[%s5 + $0xe8] sm:$0xff] %v1249
    %1286 = vst [vmem:[%s5 + $0xf0] sm:$0xff] %v1252
    %1287 = vst [vmem:[%s5 + $0xf8] sm:$0xff] %v1254
  $region29: #{mlppool_forward.1} parent=0 // pred_fallthru
    _
  // Predicated region
  $region30: #{mlppool_forward.1} parent=0 // pred_check
    _
  $region31: #{mlppool_forward.1} parent=0 // pred_check_branch
    %1289 = sbr.rel (0) target = $region33
  $region32: #{mlppool_forward.1} parent=0 // pred_region
    _
  $region33: #{mlppool_forward.1} parent=0 // pred_fallthru
    _
  // Predicated region
  $region34: #{mlppool_forward.1} parent=0 // pred_check
    _
  $region35: #{mlppool_forward.1} parent=0 // pred_check_branch
    %1291 = sbr.rel (0) target = $region37
  $region36: #{mlppool_forward.1} parent=0 // pred_region
    _
  $region37: #{mlppool_forward.1} parent=0 // pred_fallthru
    _

</llo_original>
